<compile_context>
chip_gen: v7x
topology: tpu7x:2x2x1
jax: 0.10.0
libtpu: 0.0.40
codegen_flags: <defaults>
</compile_context>

<pallas_src>
import functools

import jax
import jax.numpy as jnp
from jax.experimental import pallas as pl
from jax.experimental.pallas import tpu as pltpu


def _sublayer_body(x_ref, w_ref, b_ref, gamma_ref, beta_ref, o_ref, u_ref,
                   *, eps: float, p_dropout: float):
    x = x_ref[...].astype(jnp.float32)                        # (TN, D)
    d = x.shape[-1]

    # ---- LayerNorm (torch reference: unbiased std, divide by (std + eps)) ----
    mean = jnp.mean(x, axis=-1, keepdims=True)
    centered = x - mean
    var_unbiased = jnp.sum(centered * centered, axis=-1, keepdims=True) / (d - 1)
    std = jnp.sqrt(var_unbiased)
    inv = 1.0 / (std + eps)                                   # (TN, 1): TN divides only
    normed = gamma_ref[...] * (centered * inv) + beta_ref[...]

    # ---- Sublayer: Linear(d_layer, d_layer) on the MXU (bf16 in, f32 acc) ----
    y = jnp.dot(normed.astype(jnp.bfloat16), w_ref[...],
                preferred_element_type=jnp.float32) + b_ref[...]

    # ---- Dropout (training: zero w.p. p, scale survivors by 1/(1-p)) ----
    if p_dropout > 0.0:
        keep = u_ref[...] >= jnp.float32(p_dropout)
        y = jnp.where(keep, y * (1.0 / (1.0 - p_dropout)), 0.0)

    # ---- Residual (fresh read of the x tile; f32 x above is dead by now) ----
    o_ref[...] = (x_ref[...].astype(jnp.float32) + y).astype(o_ref.dtype)


def _sublayer_kernel_train(x_ref, w_ref, b_ref, gamma_ref, beta_ref, u_ref, o_ref,
                           *, eps: float, p_dropout: float):
    _sublayer_body(x_ref, w_ref, b_ref, gamma_ref, beta_ref, o_ref, u_ref,
                   eps=eps, p_dropout=p_dropout)


def _sublayer_kernel_eval(x_ref, w_ref, b_ref, gamma_ref, beta_ref, o_ref,
                          *, eps: float):
    _sublayer_body(x_ref, w_ref, b_ref, gamma_ref, beta_ref, o_ref, None,
                   eps=eps, p_dropout=0.0)


def sublayer_connection(x, w, b, gamma, beta, *, p_dropout: float, eps: float = 1e-6,
                        training: bool = True, dropout_key=None, tile_rows: int = 512):
    """x: (B, S, D) float32; w: (D, D) in (in, out) layout. Returns (B, S, D)."""
    B, S, D = x.shape
    N = B * S
    xf = x.reshape(N, D)
    p = float(p_dropout) if training else 0.0

    # Row tile: multiple of 8 or the full row count (satisfies the (8,128) rule).
    tn = N if N <= tile_rows else tile_rows
    grid = (pl.cdiv(N, tn),)

    w_bf16 = w.astype(jnp.bfloat16)       # cast once; stays resident in VMEM

    row_spec = pl.BlockSpec((tn, D), lambda i: (i, 0))        # tiled over rows
    w_spec = pl.BlockSpec((D, D), lambda i: (0, 0))           # resident
    vec_spec = pl.BlockSpec((1, D), lambda i: (0, 0))         # resident

    in_specs = [row_spec, w_spec, vec_spec, vec_spec, vec_spec]
    args = [xf, w_bf16, b, gamma, beta]

    if p > 0.0:
        if dropout_key is None:
            dropout_key = jax.random.PRNGKey(0)
        u = jax.random.uniform(dropout_key, (N, D), jnp.float32)
        in_specs.append(row_spec)
        args.append(u)
        kernel = functools.partial(_sublayer_kernel_train, eps=eps, p_dropout=p)
    else:
        kernel = functools.partial(_sublayer_kernel_eval, eps=eps)

    out = pl.pallas_call(
        kernel,
        out_shape=jax.ShapeDtypeStruct((N, D), x.dtype),
        grid=grid,
        in_specs=in_specs,
        out_specs=row_spec,
        compiler_params=pltpu.CompilerParams(
            dimension_semantics=("parallel",)),   # independent row tiles -> both v7x TCs
    )(*args)

    return out.reshape(B, S, D)


def _reference_eval(x, w, b, gamma, beta, eps=1e-6):
    """Pure-JAX reference, eval mode (dropout = identity), f32 matmul."""
    d = x.shape[-1]
    mean = jnp.mean(x, axis=-1, keepdims=True)
    c = x - mean
    std = jnp.sqrt(jnp.sum(c * c, axis=-1, keepdims=True) / (d - 1))
    normed = gamma[0] * (c / (std + eps)) + beta[0]
    y = normed @ w + b[0]
    return x + y


if __name__ == "__main__":
    key = jax.random.PRNGKey(0)
    k_x, k_w, k_b, k_drop = jax.random.split(key, 4)

    B, S, D = 2, 8, 128          # batch=2, seq=8, d_layer=128 (lane-aligned)
    p_dropout = 0.1

    x = jax.random.normal(k_x, (B, S, D), dtype=jnp.float32)

    # Deterministic parameter init (torch.nn.Linear-style uniform bound).
    bound = 1.0 / (D ** 0.5)
    w = jax.random.uniform(k_w, (D, D), jnp.float32, -bound, bound)   # (in, out)
    b = jax.random.uniform(k_b, (1, D), jnp.float32, -bound, bound)
    gamma = jnp.ones((1, D), jnp.float32)    # LayerNorm.std_hat
    beta = jnp.zeros((1, D), jnp.float32)    # LayerNorm.mean_hat

    # Correctness check in eval mode (dropout disabled -> deterministic).
    # Tolerance accounts for bf16 MXU operands (f32 accumulation) vs f32 reference.
    out_eval = sublayer_connection(x, w, b, gamma, beta,
                                   p_dropout=p_dropout, training=False)
    jax.block_until_ready(out_eval)
    ref = _reference_eval(x, w, b, gamma, beta)
    assert jnp.allclose(out_eval, ref, atol=2e-2, rtol=2e-2), "mismatch vs reference"

    # Training-mode run (fused Bernoulli mask + scale + residual inside the kernel).
    out_train = sublayer_connection(x, w, b, gamma, beta,
                                    p_dropout=p_dropout, training=True,
                                    dropout_key=k_drop)
    jax.block_until_ready(out_train)
    assert out_train.shape == x.shape

    print("KERNEL_OK")
</pallas_src>

<mosaic_0001>
module attributes {stable_mosaic.version = 11 : i64} {
  func.func @_sublayer_kernel_eval(%arg0: i32, %arg1: memref<16x128xf32, #tpu.memory_space<vmem>>, %arg2: memref<128x128xbf16, #tpu.memory_space<vmem>>, %arg3: memref<1x128xf32, #tpu.memory_space<vmem>>, %arg4: memref<1x128xf32, #tpu.memory_space<vmem>>, %arg5: memref<1x128xf32, #tpu.memory_space<vmem>>, %arg6: memref<16x128xf32, #tpu.memory_space<vmem>>) attributes {dimension_semantics = [#tpu.dimension_semantics<parallel>], iteration_bounds = array<i64: 1>, scalar_prefetch = 0 : i64, scratch_operands = 0 : i64, tpu.core_type = #tpu.core_type<tc>, window_params = [{transform_indices = @transform_0, window_bounds = array<i64: 16, 128>}, {pipeline_mode = #tpu.pipeline_mode<synchronous>, transform_indices = @transform_1, window_bounds = array<i64: 128, 128>}, {pipeline_mode = #tpu.pipeline_mode<synchronous>, transform_indices = @transform_2, window_bounds = array<i64: 1, 128>}, {pipeline_mode = #tpu.pipeline_mode<synchronous>, transform_indices = @transform_3, window_bounds = array<i64: 1, 128>}, {pipeline_mode = #tpu.pipeline_mode<synchronous>, transform_indices = @transform_4, window_bounds = array<i64: 1, 128>}, {transform_indices = @transform_5, window_bounds = array<i64: 16, 128>}]} {
    %c0 = arith.constant 0 : index
    %c0_0 = arith.constant 0 : index
    %0 = vector.load %arg1[%c0, %c0_0] : memref<16x128xf32, #tpu.memory_space<vmem>>, vector<16x128xf32>
    %cst = arith.constant dense<0.000000e+00> : vector<16xf32>
    %1 = vector.multi_reduction <add>, %0, %cst [1] : vector<16x128xf32> to vector<16xf32>
    %2 = vector.shape_cast %1 : vector<16xf32> to vector<16x1xf32>
    %cst_1 = arith.constant 1.280000e+02 : f32
    %3 = vector.broadcast %cst_1 : f32 to vector<16x1xf32>
    %4 = arith.divf %2, %3 : vector<16x1xf32>
    %5 = vector.broadcast %4 : vector<16x1xf32> to vector<16x128xf32>
    %6 = arith.subf %0, %5 : vector<16x128xf32>
    %7 = arith.mulf %6, %6 : vector<16x128xf32>
    %cst_2 = arith.constant dense<0.000000e+00> : vector<16xf32>
    %8 = vector.multi_reduction <add>, %7, %cst_2 [1] : vector<16x128xf32> to vector<16xf32>
    %9 = vector.shape_cast %8 : vector<16xf32> to vector<16x1xf32>
    %cst_3 = arith.constant 1.270000e+02 : f32
    %10 = vector.broadcast %cst_3 : f32 to vector<16x1xf32>
    %11 = arith.divf %9, %10 : vector<16x1xf32>
    %12 = math.sqrt %11 : vector<16x1xf32>
    %cst_4 = arith.constant 9.99999997E-7 : f32
    %13 = vector.broadcast %cst_4 : f32 to vector<16x1xf32>
    %14 = arith.addf %12, %13 : vector<16x1xf32>
    %cst_5 = arith.constant 1.000000e+00 : f32
    %15 = vector.broadcast %cst_5 : f32 to vector<16x1xf32>
    %16 = arith.divf %15, %14 : vector<16x1xf32>
    %c0_6 = arith.constant 0 : index
    %c0_7 = arith.constant 0 : index
    %17 = vector.load %arg4[%c0_6, %c0_7] : memref<1x128xf32, #tpu.memory_space<vmem>>, vector<1x128xf32>
    %18 = vector.broadcast %16 : vector<16x1xf32> to vector<16x128xf32>
    %19 = arith.mulf %6, %18 : vector<16x128xf32>
    %20 = vector.broadcast %17 : vector<1x128xf32> to vector<16x128xf32>
    %21 = arith.mulf %20, %19 : vector<16x128xf32>
    %c0_8 = arith.constant 0 : index
    %c0_9 = arith.constant 0 : index
    %22 = vector.load %arg5[%c0_8, %c0_9] : memref<1x128xf32, #tpu.memory_space<vmem>>, vector<1x128xf32>
    %23 = vector.broadcast %22 : vector<1x128xf32> to vector<16x128xf32>
    %24 = arith.addf %21, %23 : vector<16x128xf32>
    %25 = arith.truncf %24 : vector<16x128xf32> to vector<16x128xbf16>
    %c0_10 = arith.constant 0 : index
    %c0_11 = arith.constant 0 : index
    %26 = vector.load %arg2[%c0_10, %c0_11] : memref<128x128xbf16, #tpu.memory_space<vmem>>, vector<128x128xbf16>
    %cst_12 = arith.constant dense<0.000000e+00> : vector<16x128xf32>
    %27 = tpu.matmul %25, %26, %cst_12 {dimension_numbers = #tpu.dot_dimension_numbers<[1], [0], [0], [1], [0, 0, 1, 1], [], []>} : vector<16x128xbf16>, vector<128x128xbf16>, vector<16x128xf32> -> vector<16x128xf32>
    %c0_13 = arith.constant 0 : index
    %c0_14 = arith.constant 0 : index
    %28 = vector.load %arg3[%c0_13, %c0_14] : memref<1x128xf32, #tpu.memory_space<vmem>>, vector<1x128xf32>
    %29 = vector.broadcast %28 : vector<1x128xf32> to vector<16x128xf32>
    %30 = arith.addf %27, %29 : vector<16x128xf32>
    %c0_15 = arith.constant 0 : index
    %c0_16 = arith.constant 0 : index
    %31 = vector.load %arg1[%c0_15, %c0_16] : memref<16x128xf32, #tpu.memory_space<vmem>>, vector<16x128xf32>
    %32 = arith.addf %31, %30 : vector<16x128xf32>
    %c0_17 = arith.constant 0 : index
    %c0_18 = arith.constant 0 : index
    %33 = vector.load %arg6[%c0_17, %c0_18] : memref<16x128xf32, #tpu.memory_space<vmem>>, vector<16x128xf32>
    tpu.vector_store %arg6[%c0_17, %c0_18], %32 {strides = array<i32>} : memref<16x128xf32, #tpu.memory_space<vmem>>, vector<16x128xf32>,
    return
  }
  func.func @transform_0(%arg0: i32) -> (i32, i32) {
    %c0_i32 = arith.constant 0 : i32
    %c0_i32_0 = arith.constant 0 : i32
    return %arg0, %c0_i32 : i32, i32
  }
  func.func @transform_1(%arg0: i32) -> (i32, i32) {
    %c0_i32 = arith.constant 0 : i32
    %c0_i32_0 = arith.constant 0 : i32
    %c0_i32_1 = arith.constant 0 : i32
    return %c0_i32, %c0_i32_0 : i32, i32
  }
  func.func @transform_2(%arg0: i32) -> (i32, i32) {
    %c0_i32 = arith.constant 0 : i32
    %c0_i32_0 = arith.constant 0 : i32
    %c0_i32_1 = arith.constant 0 : i32
    return %c0_i32, %c0_i32_0 : i32, i32
  }
  func.func @transform_3(%arg0: i32) -> (i32, i32) {
    %c0_i32 = arith.constant 0 : i32
    %c0_i32_0 = arith.constant 0 : i32
    %c0_i32_1 = arith.constant 0 : i32
    return %c0_i32, %c0_i32_0 : i32, i32
  }
  func.func @transform_4(%arg0: i32) -> (i32, i32) {
    %c0_i32 = arith.constant 0 : i32
    %c0_i32_0 = arith.constant 0 : i32
    %c0_i32_1 = arith.constant 0 : i32
    return %c0_i32, %c0_i32_0 : i32, i32
  }
  func.func @transform_5(%arg0: i32) -> (i32, i32) {
    %c0_i32 = arith.constant 0 : i32
    %c0_i32_0 = arith.constant 0 : i32
    return %arg0, %c0_i32 : i32, i32
  }
}

</mosaic_0001>

<llo_original>
// kernel: tpu_custom_call.1
$region0: #{tpu_custom_call.1}
  #allocation0 [shape = 'u32[]', space=smem, size = 0x4, offset = 0x4, fixed_abs, tag = 'smem constant byte address 0x4 - core index']
  #allocation1 [shape = 'u32[144,128]{1,0:T(1,128)}', space=vmem, size = 0x12000, scoped, tag = 'internal scratch']
  %s0 = inlined_call_operand.hbm [shape: f32[16,128], index: 0, kind: input, shape index: {}]
  %s1 = inlined_call_operand.hbm [shape: bf16[128,128], index: 1, kind: input, shape index: {}]
  %s2 = inlined_call_operand.vmem [shape: f32[1,128], index: 2, kind: input, shape index: {}]
  %s3 = inlined_call_operand.vmem [shape: f32[1,128], index: 3, kind: input, shape index: {}]
  %s4 = inlined_call_operand.vmem [shape: f32[1,128], index: 4, kind: input, shape index: {}]
  %s5 = inlined_call_operand.hbm [shape: f32[16,128], index: 5, kind: output, shape index: {}]
  %s6 = sld [smem:[#allocation0]]
  $region38: #{tpu_custom_call.1} parent=0
    _
  %s8 = ssub.s32 1, %s6
  %s9 = scalar_select 0, %s8, %s6
  $region1: #{tpu_custom_call.1} parent=0
    #allocation2 [shape = 'u8[8192]{0}', space=vmem, size = 0x2000, scoped, tag = 'input window, operand 0, single buffered']
    #allocation3 [shape = 's32[1]{0}', space=sflag, size = 0x4, scoped, tag = 'scoped memory for tpu_custom_call.1']
    #allocation4 [shape = 's32[1]{0}', space=sflag, size = 0x4, scoped, tag = 'scoped memory for tpu_custom_call.1']
    #allocation5 [shape = 'u8[32768]{0}', space=vmem, size = 0x8000, scoped, tag = 'input window, operand 1, single buffered']
    #allocation6 [shape = 's32[1]{0}', space=sflag, size = 0x4, scoped, tag = 'scoped memory for tpu_custom_call.1']
    #allocation7 [shape = 'u8[8192]{0}', space=vmem, size = 0x2000, scoped, tag = 'output window, operand 0, single buffered']
    %10 = vsyncpa [#allocation3], 0
    %11 = vsyncpa [#allocation6], 0
    %12 = vsyncpa [#allocation4], 0
    // Predicated region
    $region2: #{tpu_custom_call.1} parent=1 // pred_check
      _
    $region3: #{tpu_custom_call.1} parent=1 // pred_check_branch
      %14 = sbr.rel (0) target = $region5
    $region4: #{tpu_custom_call.1} parent=1 // pred_region
      %s16 = ssub.s32 256, 256
      %17 = vsyncadd [#allocation3], %s16
      %s18 = sshll.u32 [#allocation2], 4
      %s19 = int_to_ptr.vmem [resolvable:$true] %s18
      %24 = dma.hbm_to_vmem [thread:$0]  %s0, 256, %s19, [#allocation3], 128, 128, 8
    $region5: #{tpu_custom_call.1} parent=1 // pred_fallthru
      _
    // Predicated region
    $region6: #{tpu_custom_call.1} parent=1 // pred_check
      _
    $region7: #{tpu_custom_call.1} parent=1 // pred_check_branch
      %26 = sbr.rel (0) target = $region9
    $region8: #{tpu_custom_call.1} parent=1 // pred_region
      %s28 = ssub.s32 1024, 1024
      %29 = vsyncadd [#allocation6], %s28
      %s30 = sshll.u32 [#allocation5], 4
      %s31 = int_to_ptr.vmem [resolvable:$true] %s30
      %36 = dma.hbm_to_vmem [thread:$0]  %s1, 1024, %s31, [#allocation6], 64, 64, 4
    $region9: #{tpu_custom_call.1} parent=1 // pred_fallthru
      _
    // Predicated region
    $region10: #{tpu_custom_call.1} parent=1 // pred_check
      _
    $region11: #{tpu_custom_call.1} parent=1 // pred_check_branch
      %38 = sbr.rel (0) target = $region13
    $region12: #{tpu_custom_call.1} parent=1 // pred_region
      _
    $region13: #{tpu_custom_call.1} parent=1 // pred_fallthru
      _
    // Predicated region
    $region14: #{tpu_custom_call.1} parent=1 // pred_check
      _
    $region15: #{tpu_custom_call.1} parent=1 // pred_check_branch
      %40 = sbr.rel (0) target = $region17
    $region16: #{tpu_custom_call.1} parent=1 // pred_region
      _
    $region17: #{tpu_custom_call.1} parent=1 // pred_fallthru
      _
    // Predicated region
    $region18: #{tpu_custom_call.1} parent=1 // pred_check
      _
    $region19: #{tpu_custom_call.1} parent=1 // pred_check_branch
      %42 = sbr.rel (0) target = $region21
    $region20: #{tpu_custom_call.1} parent=1 // pred_region
      _
    $region21: #{tpu_custom_call.1} parent=1 // pred_fallthru
      _
    // Predicated region
    $region22: #{tpu_custom_call.1} parent=1 // pred_check
      _
    $region23: #{tpu_custom_call.1} parent=1 // pred_check_branch
      %44 = sbr.rel (0) target = $region25
    $region24: #{tpu_custom_call.1} parent=1 // pred_region
      %45 = dma.done [#allocation3], 256
    $region25: #{tpu_custom_call.1} parent=1 // pred_fallthru
      _
    // Predicated region
    $region26: #{tpu_custom_call.1} parent=1 // pred_check
      _
    $region27: #{tpu_custom_call.1} parent=1 // pred_check_branch
      %47 = sbr.rel (0) target = $region29
    $region28: #{tpu_custom_call.1} parent=1 // pred_region
      %48 = dma.done [#allocation6], 1024
    $region29: #{tpu_custom_call.1} parent=1 // pred_fallthru
      _
    %v50 = vld [vmem:[#allocation2] sm:$0xff]
    %v51 = vld [vmem:[#allocation2 + $0x8] sm:$0xff]
    %52 = vadd.xlane.f32.xlu0 %v50
    %v53 = vpop.xlane.xlu0 %52
    %54 = vadd.xlane.f32.xlu0 %v51
    %v55 = vpop.xlane.xlu0 %54
    %v56 = vrcp.pop 128.0
    %v57 = vmul.f32 %v53, %v56
    %v58 = vmul.f32 %v55, %v56
    %v59 = vsub.f32 %v50, %v57
    %v60 = vsub.f32 %v51, %v58
    %v61 = vmul.f32 %v59, %v59
    %v62 = vmul.f32 %v60, %v60
    %63 = vadd.xlane.f32.xlu0 %v61
    %v64 = vpop.xlane.xlu0 %63
    %65 = vadd.xlane.f32.xlu0 %v62
    %v66 = vpop.xlane.xlu0 %65
    %v67 = vrcp.pop 127.0
    %v68 = vmul.f32 %v64, %v67
    %v69 = vmul.f32 %v66, %v67
    %v70 = vrsqrt.pop %v68
    %v71 = vmul.f32 %v68, %v70
    %vm72 = vcmp.eq.f32.partialorder %v68, inf
    %v73 = vsel %vm72, %v68, %v71
    %vm74 = vcmp.eq.f32.partialorder %v68, 0.0
    %v75 = vand.u32 %v68, 2147483648
    %v76 = vsel %vm74, %v75, %v73
    %v77 = vrsqrt.pop %v69
    %v78 = vmul.f32 %v69, %v77
    %vm79 = vcmp.eq.f32.partialorder %v69, inf
    %v80 = vsel %vm79, %v69, %v78
    %vm81 = vcmp.eq.f32.partialorder %v69, 0.0
    %v82 = vand.u32 %v69, 2147483648
    %v83 = vsel %vm81, %v82, %v80
    %v84 = vadd.f32 %v76, 1e-06
    %v85 = vadd.f32 %v83, 1e-06
    %v86 = vrcp.pop %v84
    %v87 = vmul.f32 1.0, %v86
    %v88 = vrcp.pop %v85
    %v89 = vmul.f32 1.0, %v88
    %v90 = vld [vmem:[%s3] sm:$0x1]
    %v91 = vmul.f32 %v59, %v87
    %v92 = vmul.f32 %v60, %v89
    %v94 = vlaneseq
    %v95 = vshrl.u32 %v94, 7
    %v96 = vsub.s32 0, %v95
    %v97 = vrot.slane %v90, %v96
    %v99 = vmul.f32 %v97, %v91
    %v100 = vmul.f32 %v97, %v92
    %v101 = vld [vmem:[%s4] sm:$0x1]
    %v103 = vlaneseq
    %v104 = vshrl.u32 %v103, 7
    %v105 = vsub.s32 0, %v104
    %v106 = vrot.slane %v101, %v105
    %v108 = vadd.f32 %v99, %v106
    %v109 = vadd.f32 %v100, %v106
    %v110 = vpack.c.bf16 %v109, %v108
    %v111 = vld [vmem:[#allocation5] sm:$0xf]
    %v112 = vld [vmem:[#allocation5 + $0x4] sm:$0xf]
    %v113 = vld [vmem:[#allocation5 + $0x8] sm:$0xf]
    %v114 = vld [vmem:[#allocation5 + $0xc] sm:$0xf]
    %v115 = vld [vmem:[#allocation5 + $0x10] sm:$0xf]
    %v116 = vld [vmem:[#allocation5 + $0x14] sm:$0xf]
    %v117 = vld [vmem:[#allocation5 + $0x18] sm:$0xf]
    %v118 = vld [vmem:[#allocation5 + $0x1c] sm:$0xf]
    %v119 = vld [vmem:[#allocation5 + $0x20] sm:$0xf]
    %v120 = vld [vmem:[#allocation5 + $0x24] sm:$0xf]
    %v121 = vld [vmem:[#allocation5 + $0x28] sm:$0xf]
    %v122 = vld [vmem:[#allocation5 + $0x2c] sm:$0xf]
    %v123 = vld [vmem:[#allocation5 + $0x30] sm:$0xf]
    %v124 = vld [vmem:[#allocation5 + $0x34] sm:$0xf]
    %v125 = vld [vmem:[#allocation5 + $0x38] sm:$0xf]
    %v126 = vld [vmem:[#allocation5 + $0x3c] sm:$0xf]
    %v127 = vld [vmem:[%s2] sm:$0x1]
    %v129 = vlaneseq
    %v130 = vshrl.u32 %v129, 7
    %v131 = vsub.s32 0, %v130
    %v132 = vrot.slane %v127, %v131
    %v150 = vunpack.c.l.b16 %v111
    %v151 = vunpack.c.l.b16 %v112
    %v152 = vunpack.c.l.b16 %v113
    %v153 = vunpack.c.l.b16 %v114
    %v154 = vunpack.c.l.b16 %v115
    %v155 = vunpack.c.l.b16 %v116
    %v156 = vunpack.c.l.b16 %v117
    %v157 = vunpack.c.l.b16 %v118
    %v158 = vunpack.c.l.b16 %v119
    %v159 = vunpack.c.l.b16 %v120
    %v160 = vunpack.c.l.b16 %v121
    %v161 = vunpack.c.l.b16 %v122
    %v162 = vunpack.c.l.b16 %v123
    %v163 = vunpack.c.l.b16 %v124
    %v164 = vunpack.c.l.b16 %v125
    %v165 = vunpack.c.l.b16 %v126
    %v166 = vpack.c.b16 %v151, %v150
    %v167 = vpack.c.b16 %v153, %v152
    %v168 = vpack.c.b16 %v155, %v154
    %v169 = vpack.c.b16 %v157, %v156
    %v170 = vpack.c.b16 %v159, %v158
    %v171 = vpack.c.b16 %v161, %v160
    %v172 = vpack.c.b16 %v163, %v162
    %v173 = vpack.c.b16 %v165, %v164
    %182 = vmatprep.subr.bf16.mxu0 0
    %183 = vmatpush1.bf16.msra.mxu0 %v166
    %184 = vmatprep.subr.bf16.mxu0 0
    %185 = vmatpush1.bf16.msra.mxu0 %v167
    %186 = vmatprep.subr.bf16.mxu0 0
    %187 = vmatpush1.bf16.msra.mxu0 %v168
    %188 = vmatprep.subr.bf16.mxu0 0
    %189 = vmatpush1.bf16.msra.mxu0 %v169
    %190 = vmatprep.subr.bf16.mxu0 0
    %191 = vmatpush1.bf16.msra.mxu0 %v170
    %192 = vmatprep.subr.bf16.mxu0 0
    %193 = vmatpush1.bf16.msra.mxu0 %v171
    %194 = vmatprep.subr.bf16.mxu0 0
    %195 = vmatpush1.bf16.msra.mxu0 %v172
    %196 = vmatprep.subr.bf16.mxu0 0
    %197 = vmatpush1.bf16.msra.mxu0 %v173
    %198 = vmatprep.subr.bf16.mxu0 0
    %199 = vmatpush1.bf16.msra.mxu0 0
    %200 = vmatprep.subr.bf16.mxu0 0
    %201 = vmatpush1.bf16.msra.mxu0 0
    %202 = vmatprep.subr.bf16.mxu0 0
    %203 = vmatpush1.bf16.msra.mxu0 0
    %204 = vmatprep.subr.bf16.mxu0 0
    %205 = vmatpush1.bf16.msra.mxu0 0
    %206 = vmatprep.subr.bf16.mxu0 0
    %207 = vmatpush1.bf16.msra.mxu0 0
    %208 = vmatprep.subr.bf16.mxu0 0
    %209 = vmatpush1.bf16.msra.mxu0 0
    %210 = vmatprep.subr.bf16.mxu0 0
    %211 = vmatpush1.bf16.msra.mxu0 0
    %212 = vmatprep.subr.bf16.mxu0 0
    %213 = vmatpush1.bf16.msra.mxu0 0
    %214 = vmatprep.mubr.bf16.mxu0 0
    %215 = vmatmul.mubr.bf16.gmra.mrb[0].mxu0 %v110
    %v216 = vpop.f32.mrb[0].mxu0
    %v217 = vadd.f32 %v132, %v216
    %v218 = vpop.f32.mrb[0].mxu0
    %v219 = vpop.f32.mrb[0].mxu0
    %v220 = vadd.f32 %v132, %v219
    %v221 = vpop.f32.mrb[0].mxu0
    %222 = vdwg.mxu0
    %v223 = vadd.f32 %v50, %v217
    %v224 = vadd.f32 %v51, %v220
    %225 = vst [vmem:[#allocation7] sm:$0xff] %v223
    %226 = vst [vmem:[#allocation7 + $0x8] sm:$0xff] %v224
    // Predicated region
    $region30: #{tpu_custom_call.1} parent=1 // pred_check
      _
    $region31: #{tpu_custom_call.1} parent=1 // pred_check_branch
      %228 = sbr.rel (0) target = $region33
    $region32: #{tpu_custom_call.1} parent=1 // pred_region
      %s230 = ssub.s32 256, 256
      %231 = vsyncadd [#allocation4], %s230
      %s232 = sshll.u32 [#allocation7], 4
      %s233 = int_to_ptr.vmem [resolvable:$true] %s232
      %238 = dma.vmem_to_hbm [thread:$0]  %s233, 256, %s5, [#allocation4], 128, 128, 8
    $region33: #{tpu_custom_call.1} parent=1 // pred_fallthru
      _
    // Predicated region
    $region34: #{tpu_custom_call.1} parent=1 // pred_check
      _
    $region35: #{tpu_custom_call.1} parent=1 // pred_check_branch
      %240 = sbr.rel (0) target = $region37
    $region36: #{tpu_custom_call.1} parent=1 // pred_region
      %241 = dma.done [#allocation4], 256
    $region37: #{tpu_custom_call.1} parent=1 // pred_fallthru
      _
    %242 = vsyncpa [#allocation3], 1
    %243 = vsyncpa [#allocation6], 1
    %244 = vsyncpa [#allocation4], 1

</llo_original>
